<compile_context>
chip_gen: v5e
topology: v5e:2x2
jax: 0.10.0
libtpu: 0.0.40
codegen_flags: <defaults>
</compile_context>

<pallas_src>
import functools

import jax
import jax.numpy as jnp
from jax.experimental import pallas as pl
from jax.experimental.pallas import tpu as pltpu

SIGMA = 5.0
EPS = 1e-8
LN_EPS = 1e-5


def _layer_norm(x, g, b):
    mu = jnp.mean(x, axis=-1, keepdims=True)
    var = jnp.mean(jnp.square(x - mu), axis=-1, keepdims=True)
    return (x - mu) * jax.lax.rsqrt(var + LN_EPS) * g + b


# ----------------------------------------------------------------------------
# Kernel 1: initial_mlp (LN->Linear->ReLU->Linear->LN) + K / V projections,
#           run once over all B*N tokens (flattened rows -> better MXU fill).
# ----------------------------------------------------------------------------
def _preprocess_kernel(x_ref, g1_ref, b1_ref, w1_ref, bb1_ref, w2_ref, bb2_ref,
                       g2_ref, b2_ref, wk_ref, wv_ref, kx_ref, vx_ref):
    x = x_ref[...]                                                  # (M, D)
    xn = _layer_norm(x, g1_ref[...], b1_ref[...])
    h = jnp.maximum(jnp.dot(xn, w1_ref[...], preferred_element_type=jnp.float32)
                    + bb1_ref[...], 0.0)                            # (M, D)
    h = jnp.dot(h, w2_ref[...], preferred_element_type=jnp.float32) + bb2_ref[...]  # (M, Ds)
    proj = _layer_norm(h, g2_ref[...], b2_ref[...])
    kx_ref[...] = jnp.dot(proj, wk_ref[...], preferred_element_type=jnp.float32)
    vx_ref[...] = jnp.dot(proj, wv_ref[...], preferred_element_type=jnp.float32)


def preprocess(x2d, p):
    M, D = x2d.shape
    Ds = p['wk_t'].shape[1]
    weights = [p['imlp_ln1_g'], p['imlp_ln1_b'], p['imlp_w1_t'], p['imlp_b1'],
               p['imlp_w2_t'], p['imlp_b2'], p['imlp_ln2_g'], p['imlp_ln2_b'],
               p['wk_t'], p['wv_t']]
    full = lambda a: pl.BlockSpec(a.shape, lambda i: (0, 0))
    kx, vx = pl.pallas_call(
        _preprocess_kernel,
        grid=(1,),
        in_specs=[full(x2d)] + [full(w) for w in weights],
        out_specs=[pl.BlockSpec((M, Ds), lambda i: (0, 0))] * 2,
        out_shape=[jax.ShapeDtypeStruct((M, Ds), jnp.float32)] * 2,
        compiler_params=pltpu.CompilerParams(dimension_semantics=("arbitrary",)),
    )(x2d, *weights)
    return kx, vx


# ----------------------------------------------------------------------------
# Kernel 2: fused slot-attention — all (iters+1) attention passes, GRU+MLP slot
#           updates and the final linear, per batch element (grid=(B,)).
# ----------------------------------------------------------------------------
def _binder_fused_kernel(abs_ref, kx_ref, vx_ref,
                         slots0_ref, sp0_ref, ss0_ref,
                         ng_ref, nb_ref, wq_ref, wg_ref, bg_ref,
                         wf1_ref, bf1_ref, wf2_ref, bf2_ref,
                         wir_ref, whr_ref, br_ref,
                         wiz_ref, whz_ref, bz_ref,
                         win_ref, bin_ref, whn_ref, bhn_ref,
                         mg_ref, mb_ref, wm1_ref, bm1_ref, wm2_ref, bm2_ref,
                         wfin_ref, bfin_ref,
                         slots_out_ref, attn_out_ref, *, iters):
    abs_sel = abs_ref[...]                                          # (N, 2)
    kx = kx_ref[...]                                                # (N, Ds)
    vx = vx_ref[...]                                                # (N, Ds)
    N, Ds = kx.shape
    S = slots0_ref.shape[0]
    SN = S * N
    scale = float(Ds) ** (-0.5)

    # Load every weight once (VMEM -> vregs), reuse across all iterations.
    ng, nb = ng_ref[...], nb_ref[...]
    wq = wq_ref[...]
    wg, bg = wg_ref[...], bg_ref[...]
    wf1, bf1 = wf1_ref[...], bf1_ref[...]
    wf2, bf2 = wf2_ref[...], bf2_ref[...]
    wir, whr, br = wir_ref[...], whr_ref[...], br_ref[...]
    wiz, whz, bz = wiz_ref[...], whz_ref[...], bz_ref[...]
    win_w, bin_b, whn, bhn = win_ref[...], bin_ref[...], whn_ref[...], bhn_ref[...]
    mg, mb = mg_ref[...], mb_ref[...]
    wm1, bm1, wm2, bm2 = wm1_ref[...], bm1_ref[...], wm2_ref[...], bm2_ref[...]

    # Hoisted slot-batched helpers (computed once per batch element):
    #   abs_rep / kv_rep: tokens replicated per slot -> (S*N, .) row blocks,
    #   bd_ind / bd_mask: block-diagonal selectors for per-slot gather/scatter.
    abs_rep = jnp.concatenate([abs_sel] * S, axis=0)                # (SN, 2)
    kv_rep = jnp.concatenate([kx] * S + [vx] * S, axis=0)           # (2SN, Ds)
    row_blk = jax.lax.broadcasted_iota(jnp.int32, (SN, S), 0) // N
    col_s = jax.lax.broadcasted_iota(jnp.int32, (SN, S), 1)
    bd_ind = (row_blk == col_s).astype(jnp.float32)                 # (SN, S)
    r_s = jax.lax.broadcasted_iota(jnp.int32, (S, SN), 0)
    c_blk = jax.lax.broadcasted_iota(jnp.int32, (S, SN), 1) // N
    bd_mask = r_s == c_blk                                          # (S, SN)

    def f_mlp(x):                                                   # (M, Ds) -> (M, Ds)
        h = jnp.maximum(jnp.dot(x, wf1, preferred_element_type=jnp.float32) + bf1, 0.0)
        return jnp.dot(h, wf2, preferred_element_type=jnp.float32) + bf2

    def attention(slots, sp, ss):
        slots_n = _layer_norm(slots, ng, nb)                        # (S, Ds)
        q = jnp.dot(slots_n, wq, preferred_element_type=jnp.float32)  # (S, Ds)

        # Relative grid for all slots at once, kept flat as (SN, .) rows.
        sp_rep = jnp.dot(bd_ind, sp, preferred_element_type=jnp.float32)   # (SN, 2)
        ss_rep = jnp.dot(bd_ind, ss, preferred_element_type=jnp.float32)   # (SN, 2)
        rel = (abs_rep - sp_rep) / (ss_rep * SIGMA)                 # (SN, 2)
        # g(rel): explicit K=2 contraction (avoids a tiny-K matmul)
        grel = rel[:, 0:1] * wg[0:1, :] + rel[:, 1:2] * wg[1:2, :] + bg     # (SN, Ds)

        # K and V features for every slot in two (2SN, Ds)=(128,32) MXU matmuls.
        feats = f_mlp(kv_rep + jnp.concatenate([grel, grel], axis=0))       # (2SN, Ds)
        k_all = feats[:SN].reshape(S, N, Ds)                        # (S, N, Ds)
        v_flat = feats[SN:]                                         # (SN, Ds)

        # Attention logits (S, N): lane-reduce of k * q per slot.
        dots = jnp.sum(k_all * q[:, None, :], axis=-1) * scale      # (S, N)
        m = jnp.max(dots, axis=0, keepdims=True)                    # softmax over slots
        e = jnp.exp(dots - m)
        attn = e * pl.reciprocal(jnp.sum(e, axis=0, keepdims=True), approx=True)
        attn = attn + EPS
        # token-normalisation (per slot over tokens)
        attn = attn * pl.reciprocal(jnp.sum(attn, axis=-1, keepdims=True), approx=True)

        # Weighted-mean updates as block-diagonal attention matmuls (MXU).
        a_bd = jnp.where(bd_mask, jnp.concatenate([attn] * S, axis=1), 0.0)  # (S, SN)
        upd = jnp.dot(a_bd, v_flat, preferred_element_type=jnp.float32)      # (S, Ds)
        sp_new = jnp.dot(attn, abs_sel, preferred_element_type=jnp.float32)  # (S, 2)
        diff = abs_rep - jnp.dot(bd_ind, sp_new, preferred_element_type=jnp.float32)
        ss_new = jnp.sqrt(jnp.dot(a_bd, jnp.square(diff),
                                  preferred_element_type=jnp.float32) + EPS)  # (S, 2)
        return slots_n, attn, upd, sp_new, ss_new

    def slot_update(x, h):                                          # GRUCell + pre-LN MLP
        r = jax.nn.sigmoid(jnp.dot(x, wir, preferred_element_type=jnp.float32)
                           + jnp.dot(h, whr, preferred_element_type=jnp.float32) + br)
        z = jax.nn.sigmoid(jnp.dot(x, wiz, preferred_element_type=jnp.float32)
                           + jnp.dot(h, whz, preferred_element_type=jnp.float32) + bz)
        n = jnp.tanh(jnp.dot(x, win_w, preferred_element_type=jnp.float32) + bin_b
                     + r * (jnp.dot(h, whn, preferred_element_type=jnp.float32) + bhn))
        h_new = (1.0 - z) * n + z * h
        y = _layer_norm(h_new, mg, mb)
        y = jnp.maximum(jnp.dot(y, wm1, preferred_element_type=jnp.float32) + bm1, 0.0)
        y = jnp.dot(y, wm2, preferred_element_type=jnp.float32) + bm2
        return y + h_new                                            # dropout = identity

    slots = slots0_ref[...]                                         # (S, Ds)
    sp = sp0_ref[...]                                               # (S, 2)
    ss = ss0_ref[...]                                               # (S, 2)
    for t in range(iters + 1):                                      # small static trip count
        slots_n, attn, upd, sp, ss = attention(slots, sp, ss)
        if t != iters:
            slots = slot_update(upd, slots)

    # final_layer on the LayerNorm'd slots of the last pass
    slots_out_ref[...] = (jnp.dot(slots_n, wfin_ref[...],
                                  preferred_element_type=jnp.float32) + bfin_ref[...])
    attn_out_ref[...] = attn                                        # already (S, N)


def binder_fused(abs_sel, kx, vx, p, *, iters):
    B, N, _ = abs_sel.shape
    S, Ds = p['slots'].shape[1], p['slots'].shape[2]
    weights = [p['slots'][0], p['S_p'][0], p['S_s'][0],
               p['norm_g'], p['norm_b'], p['wq_t'], p['wg_t'], p['bg'],
               p['wf1_t'], p['bf1'], p['wf2_t'], p['bf2'],
               p['gru_wir_t'], p['gru_whr_t'], p['gru_br'],
               p['gru_wiz_t'], p['gru_whz_t'], p['gru_bz'],
               p['gru_win_t'], p['gru_bin'], p['gru_whn_t'], p['gru_bhn'],
               p['mlp_ln_g'], p['mlp_ln_b'], p['mlp_w1_t'], p['mlp_b1'],
               p['mlp_w2_t'], p['mlp_b2'],
               p['wfin_t'], p['bfin']]
    wspec = lambda a: pl.BlockSpec(a.shape, lambda b: (0, 0))
    in_specs = [
        pl.BlockSpec((None, N, 2), lambda b: (b, 0, 0)),
        pl.BlockSpec((None, N, Ds), lambda b: (b, 0, 0)),
        pl.BlockSpec((None, N, Ds), lambda b: (b, 0, 0)),
    ] + [wspec(w) for w in weights]
    out_specs = [
        pl.BlockSpec((None, S, Ds), lambda b: (b, 0, 0)),
        pl.BlockSpec((None, S, N), lambda b: (b, 0, 0)),
    ]
    out_shape = [
        jax.ShapeDtypeStruct((B, S, Ds), jnp.float32),
        jax.ShapeDtypeStruct((B, S, N), jnp.float32),
    ]
    return pl.pallas_call(
        functools.partial(_binder_fused_kernel, iters=iters),
        grid=(B,),
        in_specs=in_specs,
        out_specs=out_specs,
        out_shape=out_shape,
        compiler_params=pltpu.CompilerParams(dimension_semantics=("parallel",)),
    )(abs_sel, kx, vx, *weights)


# ----------------------------------------------------------------------------
# Full forward
# ----------------------------------------------------------------------------
def spatial_binder_forward(p, inputs, token_indices, *, num_slots, slot_dim, iters, n_frame):
    B, N, D = inputs.shape
    S, Ds = num_slots, slot_dim

    # Data-dependent per-batch gather of the absolute grid stays in JAX.
    abs_sel = jnp.take(p['abs_grid'], token_indices, axis=0)        # (B, N, 2)

    # initial_mlp + K/V projections, one kernel call over all B*N tokens.
    kx2, vx2 = preprocess(inputs.reshape(B * N, D), p)
    kx = kx2.reshape(B, N, Ds)
    vx = vx2.reshape(B, N, Ds)

    # Fused slot-attention loop (per batch element, fully in VMEM).
    slots_out, attn_sn = binder_fused(abs_sel, kx, vx, p, iters=iters)  # (B,S,Ds), (B,S,N)

    F = 2 * n_frame + 1
    attn = attn_sn.reshape(B // F, F, S, N)[:, n_frame]             # (B//F, S, N)
    return slots_out, attn


# ----------------------------------------------------------------------------
# Deterministic parameter init (synthetic; shapes follow Spatial_Binder.__init__)
# ----------------------------------------------------------------------------
def init_params(key, D, Ds, S, res_h, res_w):
    it = iter(jax.random.split(key, 40))

    def lin_w(fan_in, shape):
        bound = 1.0 / float(fan_in) ** 0.5
        return jax.random.uniform(next(it), shape, jnp.float32, -bound, bound)

    p = {}
    xs = jnp.linspace(-1.0, 1.0, res_w)
    ys = jnp.linspace(-1.0, 1.0, res_h)
    gx, gy = jnp.meshgrid(xs, ys, indexing='xy')
    p['abs_grid'] = jnp.stack([gx.reshape(-1), gy.reshape(-1)], axis=-1).astype(jnp.float32)

    lim = (6.0 / (S + Ds)) ** 0.5
    p['slots'] = jax.random.uniform(next(it), (1, S, Ds), jnp.float32, -lim, lim)
    p['S_s'] = 0.02 * jax.random.normal(next(it), (1, S, 2), jnp.float32)
    p['S_p'] = 0.02 * jax.random.normal(next(it), (1, S, 2), jnp.float32)

    # initial_mlp: LN(D) -> Linear(D,D) -> ReLU -> Linear(D,Ds) -> LN(Ds)
    p['imlp_ln1_g'] = jnp.ones((1, D), jnp.float32)
    p['imlp_ln1_b'] = jnp.zeros((1, D), jnp.float32)
    p['imlp_w1_t'] = lin_w(D, (D, D))
    p['imlp_b1'] = lin_w(D, (1, D))
    p['imlp_w2_t'] = lin_w(D, (D, Ds))
    p['imlp_b2'] = lin_w(D, (1, Ds))
    p['imlp_ln2_g'] = jnp.ones((1, Ds), jnp.float32)
    p['imlp_ln2_b'] = jnp.zeros((1, Ds), jnp.float32)

    p['wk_t'] = lin_w(Ds, (Ds, Ds))
    p['wv_t'] = lin_w(Ds, (Ds, Ds))
    p['wq_t'] = lin_w(Ds, (Ds, Ds))
    p['norm_g'] = jnp.ones((1, Ds), jnp.float32)
    p['norm_b'] = jnp.zeros((1, Ds), jnp.float32)

    p['wg_t'] = lin_w(2, (2, Ds))
    p['bg'] = lin_w(2, (1, Ds))
    p['wf1_t'] = lin_w(Ds, (Ds, Ds))
    p['bf1'] = lin_w(Ds, (1, Ds))
    p['wf2_t'] = lin_w(Ds, (Ds, Ds))
    p['bf2'] = lin_w(Ds, (1, Ds))

    # GRUCell (weights split per gate, stored transposed for x @ W)
    for name in ['gru_wir_t', 'gru_wiz_t', 'gru_win_t', 'gru_whr_t', 'gru_whz_t', 'gru_whn_t']:
        p[name] = lin_w(Ds, (Ds, Ds))
    for name in ['gru_br', 'gru_bz', 'gru_bin', 'gru_bhn']:
        p[name] = lin_w(Ds, (1, Ds))

    # MLP (Ds -> 4Ds -> Ds, pre-LN, residual)
    p['mlp_ln_g'] = jnp.ones((1, Ds), jnp.float32)
    p['mlp_ln_b'] = jnp.zeros((1, Ds), jnp.float32)
    p['mlp_w1_t'] = lin_w(Ds, (Ds, 4 * Ds))
    p['mlp_b1'] = lin_w(Ds, (1, 4 * Ds))
    p['mlp_w2_t'] = lin_w(4 * Ds, (4 * Ds, Ds))
    p['mlp_b2'] = lin_w(4 * Ds, (1, Ds))

    p['wfin_t'] = lin_w(Ds, (Ds, Ds))
    p['bfin'] = lin_w(Ds, (1, Ds))
    return p


if __name__ == "__main__":
    # Small config consistent with the module:
    #   resize_to=(32,32), patch_size=8 -> res 4x4 -> N tokens = 16
    #   num_slots=4, slot_dim=32, slot_att_iter=3, N_frame=1 (B divisible by 3)
    B, N, D = 6, 16, 32
    S, Ds = 4, 32
    ITERS = 3
    RES_H = RES_W = 4
    N_FRAME = 1

    key = jax.random.PRNGKey(0)
    kp, kin, kidx = jax.random.split(key, 3)
    params = init_params(kp, D, Ds, S, RES_H, RES_W)
    inputs = jax.random.normal(kin, (B, N, D), jnp.float32)
    token_indices = jax.random.randint(kidx, (B, N), 0, RES_H * RES_W)

    slots_out, attn = spatial_binder_forward(
        params, inputs, token_indices,
        num_slots=S, slot_dim=Ds, iters=ITERS, n_frame=N_FRAME)
    jax.block_until_ready((slots_out, attn))

    assert slots_out.shape == (B, S, Ds)
    assert attn.shape == (B // (2 * N_FRAME + 1), S, N)
    assert bool(jnp.all(jnp.isfinite(slots_out))) and bool(jnp.all(jnp.isfinite(attn)))
    print("KERNEL_OK")
</pallas_src>

<mosaic_0001>
module attributes {stable_mosaic.version = 11 : i64} {
  func.func @_preprocess_kernel(%arg0: i32, %arg1: memref<96x32xf32, #tpu.memory_space<vmem>>, %arg2: memref<1x32xf32, #tpu.memory_space<vmem>>, %arg3: memref<1x32xf32, #tpu.memory_space<vmem>>, %arg4: memref<32x32xf32, #tpu.memory_space<vmem>>, %arg5: memref<1x32xf32, #tpu.memory_space<vmem>>, %arg6: memref<32x32xf32, #tpu.memory_space<vmem>>, %arg7: memref<1x32xf32, #tpu.memory_space<vmem>>, %arg8: memref<1x32xf32, #tpu.memory_space<vmem>>, %arg9: memref<1x32xf32, #tpu.memory_space<vmem>>, %arg10: memref<32x32xf32, #tpu.memory_space<vmem>>, %arg11: memref<32x32xf32, #tpu.memory_space<vmem>>, %arg12: memref<96x32xf32, #tpu.memory_space<vmem>>, %arg13: memref<96x32xf32, #tpu.memory_space<vmem>>) attributes {dimension_semantics = [#tpu.dimension_semantics<arbitrary>], iteration_bounds = array<i64: 1>, scalar_prefetch = 0 : i64, scratch_operands = 0 : i64, tpu.core_type = #tpu.core_type<tc>, window_params = [{pipeline_mode = #tpu.pipeline_mode<synchronous>, transform_indices = @transform_0, window_bounds = array<i64: 96, 32>}, {pipeline_mode = #tpu.pipeline_mode<synchronous>, transform_indices = @transform_1, window_bounds = array<i64: 1, 32>}, {pipeline_mode = #tpu.pipeline_mode<synchronous>, transform_indices = @transform_2, window_bounds = array<i64: 1, 32>}, {pipeline_mode = #tpu.pipeline_mode<synchronous>, transform_indices = @transform_3, window_bounds = array<i64: 32, 32>}, {pipeline_mode = #tpu.pipeline_mode<synchronous>, transform_indices = @transform_4, window_bounds = array<i64: 1, 32>}, {pipeline_mode = #tpu.pipeline_mode<synchronous>, transform_indices = @transform_5, window_bounds = array<i64: 32, 32>}, {pipeline_mode = #tpu.pipeline_mode<synchronous>, transform_indices = @transform_6, window_bounds = array<i64: 1, 32>}, {pipeline_mode = #tpu.pipeline_mode<synchronous>, transform_indices = @transform_7, window_bounds = array<i64: 1, 32>}, {pipeline_mode = #tpu.pipeline_mode<synchronous>, transform_indices = @transform_8, window_bounds = array<i64: 1, 32>}, {pipeline_mode = #tpu.pipeline_mode<synchronous>, transform_indices = @transform_9, window_bounds = array<i64: 32, 32>}, {pipeline_mode = #tpu.pipeline_mode<synchronous>, transform_indices = @transform_10, window_bounds = array<i64: 32, 32>}, {pipeline_mode = #tpu.pipeline_mode<synchronous>, transform_indices = @transform_11, window_bounds = array<i64: 96, 32>}, {pipeline_mode = #tpu.pipeline_mode<synchronous>, transform_indices = @transform_12, window_bounds = array<i64: 96, 32>}]} {
    %c0 = arith.constant 0 : index
    %c0_0 = arith.constant 0 : index
    %0 = vector.load %arg1[%c0, %c0_0] : memref<96x32xf32, #tpu.memory_space<vmem>>, vector<96x32xf32>
    %c0_1 = arith.constant 0 : index
    %c0_2 = arith.constant 0 : index
    %1 = vector.load %arg2[%c0_1, %c0_2] : memref<1x32xf32, #tpu.memory_space<vmem>>, vector<1x32xf32>
    %c0_3 = arith.constant 0 : index
    %c0_4 = arith.constant 0 : index
    %2 = vector.load %arg3[%c0_3, %c0_4] : memref<1x32xf32, #tpu.memory_space<vmem>>, vector<1x32xf32>
    %cst = arith.constant dense<0.000000e+00> : vector<96xf32>
    %3 = vector.multi_reduction <add>, %0, %cst [1] : vector<96x32xf32> to vector<96xf32>
    %4 = vector.shape_cast %3 : vector<96xf32> to vector<96x1xf32>
    %cst_5 = arith.constant 3.200000e+01 : f32
    %5 = vector.broadcast %cst_5 : f32 to vector<96x1xf32>
    %6 = arith.divf %4, %5 : vector<96x1xf32>
    %7 = vector.broadcast %6 : vector<96x1xf32> to vector<96x32xf32>
    %8 = arith.subf %0, %7 : vector<96x32xf32>
    %9 = arith.mulf %8, %8 : vector<96x32xf32>
    %cst_6 = arith.constant dense<0.000000e+00> : vector<96xf32>
    %10 = vector.multi_reduction <add>, %9, %cst_6 [1] : vector<96x32xf32> to vector<96xf32>
    %11 = vector.shape_cast %10 : vector<96xf32> to vector<96x1xf32>
    %cst_7 = arith.constant 3.200000e+01 : f32
    %12 = vector.broadcast %cst_7 : f32 to vector<96x1xf32>
    %13 = arith.divf %11, %12 : vector<96x1xf32>
    %14 = vector.broadcast %6 : vector<96x1xf32> to vector<96x32xf32>
    %15 = arith.subf %0, %14 : vector<96x32xf32>
    %cst_8 = arith.constant 9.99999974E-6 : f32
    %16 = vector.broadcast %cst_8 : f32 to vector<96x1xf32>
    %17 = arith.addf %13, %16 : vector<96x1xf32>
    %18 = math.rsqrt %17 : vector<96x1xf32>
    %19 = vector.broadcast %18 : vector<96x1xf32> to vector<96x32xf32>
    %20 = arith.mulf %15, %19 : vector<96x32xf32>
    %21 = vector.broadcast %1 : vector<1x32xf32> to vector<96x32xf32>
    %22 = arith.mulf %20, %21 : vector<96x32xf32>
    %23 = vector.broadcast %2 : vector<1x32xf32> to vector<96x32xf32>
    %24 = arith.addf %22, %23 : vector<96x32xf32>
    %c0_9 = arith.constant 0 : index
    %c0_10 = arith.constant 0 : index
    %25 = vector.load %arg4[%c0_9, %c0_10] : memref<32x32xf32, #tpu.memory_space<vmem>>, vector<32x32xf32>
    %cst_11 = arith.constant dense<0.000000e+00> : vector<96x32xf32>
    %26 = tpu.matmul %24, %25, %cst_11 {dimension_numbers = #tpu.dot_dimension_numbers<[1], [0], [0], [1], [0, 0, 1, 1], [], []>} : vector<96x32xf32>, vector<32x32xf32>, vector<96x32xf32> -> vector<96x32xf32>
    %c0_12 = arith.constant 0 : index
    %c0_13 = arith.constant 0 : index
    %27 = vector.load %arg5[%c0_12, %c0_13] : memref<1x32xf32, #tpu.memory_space<vmem>>, vector<1x32xf32>
    %28 = vector.broadcast %27 : vector<1x32xf32> to vector<96x32xf32>
    %29 = arith.addf %26, %28 : vector<96x32xf32>
    %cst_14 = arith.constant 0.000000e+00 : f32
    %30 = vector.broadcast %cst_14 : f32 to vector<96x32xf32>
    %31 = arith.maximumf %29, %30 : vector<96x32xf32>
    %c0_15 = arith.constant 0 : index
    %c0_16 = arith.constant 0 : index
    %32 = vector.load %arg6[%c0_15, %c0_16] : memref<32x32xf32, #tpu.memory_space<vmem>>, vector<32x32xf32>
    %cst_17 = arith.constant dense<0.000000e+00> : vector<96x32xf32>
    %33 = tpu.matmul %31, %32, %cst_17 {dimension_numbers = #tpu.dot_dimension_numbers<[1], [0], [0], [1], [0, 0, 1, 1], [], []>} : vector<96x32xf32>, vector<32x32xf32>, vector<96x32xf32> -> vector<96x32xf32>
    %c0_18 = arith.constant 0 : index
    %c0_19 = arith.constant 0 : index
    %34 = vector.load %arg7[%c0_18, %c0_19] : memref<1x32xf32, #tpu.memory_space<vmem>>, vector<1x32xf32>
    %35 = vector.broadcast %34 : vector<1x32xf32> to vector<96x32xf32>
    %36 = arith.addf %33, %35 : vector<96x32xf32>
    %c0_20 = arith.constant 0 : index
    %c0_21 = arith.constant 0 : index
    %37 = vector.load %arg8[%c0_20, %c0_21] : memref<1x32xf32, #tpu.memory_space<vmem>>, vector<1x32xf32>
    %c0_22 = arith.constant 0 : index
    %c0_23 = arith.constant 0 : index
    %38 = vector.load %arg9[%c0_22, %c0_23] : memref<1x32xf32, #tpu.memory_space<vmem>>, vector<1x32xf32>
    %cst_24 = arith.constant dense<0.000000e+00> : vector<96xf32>
    %39 = vector.multi_reduction <add>, %36, %cst_24 [1] : vector<96x32xf32> to vector<96xf32>
    %40 = vector.shape_cast %39 : vector<96xf32> to vector<96x1xf32>
    %cst_25 = arith.constant 3.200000e+01 : f32
    %41 = vector.broadcast %cst_25 : f32 to vector<96x1xf32>
    %42 = arith.divf %40, %41 : vector<96x1xf32>
    %43 = vector.broadcast %42 : vector<96x1xf32> to vector<96x32xf32>
    %44 = arith.subf %36, %43 : vector<96x32xf32>
    %45 = arith.mulf %44, %44 : vector<96x32xf32>
    %cst_26 = arith.constant dense<0.000000e+00> : vector<96xf32>
    %46 = vector.multi_reduction <add>, %45, %cst_26 [1] : vector<96x32xf32> to vector<96xf32>
    %47 = vector.shape_cast %46 : vector<96xf32> to vector<96x1xf32>
    %cst_27 = arith.constant 3.200000e+01 : f32
    %48 = vector.broadcast %cst_27 : f32 to vector<96x1xf32>
    %49 = arith.divf %47, %48 : vector<96x1xf32>
    %50 = vector.broadcast %42 : vector<96x1xf32> to vector<96x32xf32>
    %51 = arith.subf %36, %50 : vector<96x32xf32>
    %cst_28 = arith.constant 9.99999974E-6 : f32
    %52 = vector.broadcast %cst_28 : f32 to vector<96x1xf32>
    %53 = arith.addf %49, %52 : vector<96x1xf32>
    %54 = math.rsqrt %53 : vector<96x1xf32>
    %55 = vector.broadcast %54 : vector<96x1xf32> to vector<96x32xf32>
    %56 = arith.mulf %51, %55 : vector<96x32xf32>
    %57 = vector.broadcast %37 : vector<1x32xf32> to vector<96x32xf32>
    %58 = arith.mulf %56, %57 : vector<96x32xf32>
    %59 = vector.broadcast %38 : vector<1x32xf32> to vector<96x32xf32>
    %60 = arith.addf %58, %59 : vector<96x32xf32>
    %c0_29 = arith.constant 0 : index
    %c0_30 = arith.constant 0 : index
    %61 = vector.load %arg10[%c0_29, %c0_30] : memref<32x32xf32, #tpu.memory_space<vmem>>, vector<32x32xf32>
    %cst_31 = arith.constant dense<0.000000e+00> : vector<96x32xf32>
    %62 = tpu.matmul %60, %61, %cst_31 {dimension_numbers = #tpu.dot_dimension_numbers<[1], [0], [0], [1], [0, 0, 1, 1], [], []>} : vector<96x32xf32>, vector<32x32xf32>, vector<96x32xf32> -> vector<96x32xf32>
    %c0_32 = arith.constant 0 : index
    %c0_33 = arith.constant 0 : index
    %63 = vector.load %arg12[%c0_32, %c0_33] : memref<96x32xf32, #tpu.memory_space<vmem>>, vector<96x32xf32>
    tpu.vector_store %arg12[%c0_32, %c0_33], %62 {strides = array<i32>} : memref<96x32xf32, #tpu.memory_space<vmem>>, vector<96x32xf32>,
    %c0_34 = arith.constant 0 : index
    %c0_35 = arith.constant 0 : index
    %64 = vector.load %arg11[%c0_34, %c0_35] : memref<32x32xf32, #tpu.memory_space<vmem>>, vector<32x32xf32>
    %cst_36 = arith.constant dense<0.000000e+00> : vector<96x32xf32>
    %65 = tpu.matmul %60, %64, %cst_36 {dimension_numbers = #tpu.dot_dimension_numbers<[1], [0], [0], [1], [0, 0, 1, 1], [], []>} : vector<96x32xf32>, vector<32x32xf32>, vector<96x32xf32> -> vector<96x32xf32>
    %c0_37 = arith.constant 0 : index
    %c0_38 = arith.constant 0 : index
    %66 = vector.load %arg13[%c0_37, %c0_38] : memref<96x32xf32, #tpu.memory_space<vmem>>, vector<96x32xf32>
    tpu.vector_store %arg13[%c0_37, %c0_38], %65 {strides = array<i32>} : memref<96x32xf32, #tpu.memory_space<vmem>>, vector<96x32xf32>,
    return
  }
  func.func @transform_0(%arg0: i32) -> (i32, i32) {
    %c0_i32 = arith.constant 0 : i32
    %c0_i32_0 = arith.constant 0 : i32
    %c0_i32_1 = arith.constant 0 : i32
    return %c0_i32, %c0_i32_0 : i32, i32
  }
  func.func @transform_1(%arg0: i32) -> (i32, i32) {
    %c0_i32 = arith.constant 0 : i32
    %c0_i32_0 = arith.constant 0 : i32
    %c0_i32_1 = arith.constant 0 : i32
    return %c0_i32, %c0_i32_0 : i32, i32
  }
  func.func @transform_2(%arg0: i32) -> (i32, i32) {
    %c0_i32 = arith.constant 0 : i32
    %c0_i32_0 = arith.constant 0 : i32
    %c0_i32_1 = arith.constant 0 : i32
    return %c0_i32, %c0_i32_0 : i32, i32
  }
  func.func @transform_3(%arg0: i32) -> (i32, i32) {
    %c0_i32 = arith.constant 0 : i32
    %c0_i32_0 = arith.constant 0 : i32
    %c0_i32_1 = arith.constant 0 : i32
    return %c0_i32, %c0_i32_0 : i32, i32
  }
  func.func @transform_4(%arg0: i32) -> (i32, i32) {
    %c0_i32 = arith.constant 0 : i32
    %c0_i32_0 = arith.constant 0 : i32
    %c0_i32_1 = arith.constant 0 : i32
    return %c0_i32, %c0_i32_0 : i32, i32
  }
  func.func @transform_5(%arg0: i32) -> (i32, i32) {
    %c0_i32 = arith.constant 0 : i32
    %c0_i32_0 = arith.constant 0 : i32
    %c0_i32_1 = arith.constant 0 : i32
    return %c0_i32, %c0_i32_0 : i32, i32
  }
  func.func @transform_6(%arg0: i32) -> (i32, i32) {
    %c0_i32 = arith.constant 0 : i32
    %c0_i32_0 = arith.constant 0 : i32
    %c0_i32_1 = arith.constant 0 : i32
    return %c0_i32, %c0_i32_0 : i32, i32
  }
  func.func @transform_7(%arg0: i32) -> (i32, i32) {
    %c0_i32 = arith.constant 0 : i32
    %c0_i32_0 = arith.constant 0 : i32
    %c0_i32_1 = arith.constant 0 : i32
    return %c0_i32, %c0_i32_0 : i32, i32
  }
  func.func @transform_8(%arg0: i32) -> (i32, i32) {
    %c0_i32 = arith.constant 0 : i32
    %c0_i32_0 = arith.constant 0 : i32
    %c0_i32_1 = arith.constant 0 : i32
    return %c0_i32, %c0_i32_0 : i32, i32
  }
  func.func @transform_9(%arg0: i32) -> (i32, i32) {
    %c0_i32 = arith.constant 0 : i32
    %c0_i32_0 = arith.constant 0 : i32
    %c0_i32_1 = arith.constant 0 : i32
    return %c0_i32, %c0_i32_0 : i32, i32
  }
  func.func @transform_10(%arg0: i32) -> (i32, i32) {
    %c0_i32 = arith.constant 0 : i32
    %c0_i32_0 = arith.constant 0 : i32
    %c0_i32_1 = arith.constant 0 : i32
    return %c0_i32, %c0_i32_0 : i32, i32
  }
  func.func @transform_11(%arg0: i32) -> (i32, i32) {
    %c0_i32 = arith.constant 0 : i32
    %c0_i32_0 = arith.constant 0 : i32
    %c0_i32_1 = arith.constant 0 : i32
    return %c0_i32, %c0_i32_0 : i32, i32
  }
  func.func @transform_12(%arg0: i32) -> (i32, i32) {
    %c0_i32 = arith.constant 0 : i32
    %c0_i32_0 = arith.constant 0 : i32
    %c0_i32_1 = arith.constant 0 : i32
    return %c0_i32, %c0_i32_0 : i32, i32
  }
}

</mosaic_0001>

<llo_original>
// kernel: tpu_custom_call.1
$region0: #{tpu_custom_call.1}
  #allocation0 [shape = 'u32[]', space=smem, size = 0x4, offset = 0x4, fixed_abs, tag = 'smem constant byte address 0x4 - core index']
  #allocation1 [shape = 'u32[72,128]{1,0:T(1,128)}', space=vmem, size = 0x9000, scoped, tag = 'internal scratch']
  %s0 = inlined_call_operand.vmem [shape: f32[96,32], index: 0, kind: input, shape index: {}]
  %s1 = inlined_call_operand.hbm [shape: f32[1,32], index: 1, kind: input, shape index: {}]
  %s2 = inlined_call_operand.vmem [shape: f32[1,32], index: 2, kind: input, shape index: {}]
  %s3 = inlined_call_operand.vmem [shape: f32[32,32], index: 3, kind: input, shape index: {}]
  %s4 = inlined_call_operand.vmem [shape: f32[1,32], index: 4, kind: input, shape index: {}]
  %s5 = inlined_call_operand.vmem [shape: f32[32,32], index: 5, kind: input, shape index: {}]
  %s6 = inlined_call_operand.vmem [shape: f32[1,32], index: 6, kind: input, shape index: {}]
  %s7 = inlined_call_operand.vmem [shape: f32[1,32], index: 7, kind: input, shape index: {}]
  %s8 = inlined_call_operand.vmem [shape: f32[1,32], index: 8, kind: input, shape index: {}]
  %s9 = inlined_call_operand.vmem [shape: f32[32,32], index: 9, kind: input, shape index: {}]
  %s10 = inlined_call_operand.vmem [shape: f32[32,32], index: 10, kind: input, shape index: {}]
  %s11 = inlined_call_operand.vmem [shape: f32[96,32], index: 11, kind: output, shape index: {0}]
  %s12 = inlined_call_operand.vmem [shape: f32[96,32], index: 12, kind: output, shape index: {1}]
  %13 = xla_tuple %s11, %s12
  %s14 = sld [smem:[#allocation0]]
  $region66: #{tpu_custom_call.1} parent=0
    _
  %s16 = ssub.s32 1, %s14
  %s17 = scalar_select 0, %s16, %s14
  $region1: #{tpu_custom_call.1} parent=0
    #allocation2 [shape = 'u8[512]{0}', space=vmem, size = 0x400, scoped, tag = 'input window, operand 1, single buffered']
    #allocation3 [shape = 's32[1]{0}', space=sflag, size = 0x4, scoped, tag = 'scoped memory for tpu_custom_call.1']
    %18 = vsyncpa [#allocation3], 0
    // Predicated region
    $region2: #{tpu_custom_call.1} parent=1 // pred_check
      _
    $region3: #{tpu_custom_call.1} parent=1 // pred_check_branch
      %20 = sbr.rel (0) target = $region5
    $region4: #{tpu_custom_call.1} parent=1 // pred_region
      _
    $region5: #{tpu_custom_call.1} parent=1 // pred_fallthru
      _
    // Predicated region
    $region6: #{tpu_custom_call.1} parent=1 // pred_check
      _
    $region7: #{tpu_custom_call.1} parent=1 // pred_check_branch
      %22 = sbr.rel (0) target = $region9
    $region8: #{tpu_custom_call.1} parent=1 // pred_region
      %24 = vsyncadd [#allocation3], 0
      %s26 = sshll.u32 %s1, 4
      %s27 = int_to_ptr.hbm [resolvable:$true] %s26
      %s28 = sshll.u32 [#allocation2], 4
      %s29 = int_to_ptr.vmem [resolvable:$true] %s28
      %31 = dma.hbm_to_vmem [thread:$0]  %s27, 16, %s29, [#allocation3]
    $region9: #{tpu_custom_call.1} parent=1 // pred_fallthru
      _
    // Predicated region
    $region10: #{tpu_custom_call.1} parent=1 // pred_check
      _
    $region11: #{tpu_custom_call.1} parent=1 // pred_check_branch
      %33 = sbr.rel (0) target = $region13
    $region12: #{tpu_custom_call.1} parent=1 // pred_region
      _
    $region13: #{tpu_custom_call.1} parent=1 // pred_fallthru
      _
    // Predicated region
    $region14: #{tpu_custom_call.1} parent=1 // pred_check
      _
    $region15: #{tpu_custom_call.1} parent=1 // pred_check_branch
      %35 = sbr.rel (0) target = $region17
    $region16: #{tpu_custom_call.1} parent=1 // pred_region
      _
    $region17: #{tpu_custom_call.1} parent=1 // pred_fallthru
      _
    // Predicated region
    $region18: #{tpu_custom_call.1} parent=1 // pred_check
      _
    $region19: #{tpu_custom_call.1} parent=1 // pred_check_branch
      %37 = sbr.rel (0) target = $region21
    $region20: #{tpu_custom_call.1} parent=1 // pred_region
      _
    $region21: #{tpu_custom_call.1} parent=1 // pred_fallthru
      _
    // Predicated region
    $region22: #{tpu_custom_call.1} parent=1 // pred_check
      _
    $region23: #{tpu_custom_call.1} parent=1 // pred_check_branch
      %39 = sbr.rel (0) target = $region25
    $region24: #{tpu_custom_call.1} parent=1 // pred_region
      _
    $region25: #{tpu_custom_call.1} parent=1 // pred_fallthru
      _
    // Predicated region
    $region26: #{tpu_custom_call.1} parent=1 // pred_check
      _
    $region27: #{tpu_custom_call.1} parent=1 // pred_check_branch
      %41 = sbr.rel (0) target = $region29
    $region28: #{tpu_custom_call.1} parent=1 // pred_region
      _
    $region29: #{tpu_custom_call.1} parent=1 // pred_fallthru
      _
    // Predicated region
    $region30: #{tpu_custom_call.1} parent=1 // pred_check
      _
    $region31: #{tpu_custom_call.1} parent=1 // pred_check_branch
      %43 = sbr.rel (0) target = $region33
    $region32: #{tpu_custom_call.1} parent=1 // pred_region
      _
    $region33: #{tpu_custom_call.1} parent=1 // pred_fallthru
      _
    // Predicated region
    $region34: #{tpu_custom_call.1} parent=1 // pred_check
      _
    $region35: #{tpu_custom_call.1} parent=1 // pred_check_branch
      %45 = sbr.rel (0) target = $region37
    $region36: #{tpu_custom_call.1} parent=1 // pred_region
      _
    $region37: #{tpu_custom_call.1} parent=1 // pred_fallthru
      _
    // Predicated region
    $region38: #{tpu_custom_call.1} parent=1 // pred_check
      _
    $region39: #{tpu_custom_call.1} parent=1 // pred_check_branch
      %47 = sbr.rel (0) target = $region41
    $region40: #{tpu_custom_call.1} parent=1 // pred_region
      _
    $region41: #{tpu_custom_call.1} parent=1 // pred_fallthru
      _
    // Predicated region
    $region42: #{tpu_custom_call.1} parent=1 // pred_check
      _
    $region43: #{tpu_custom_call.1} parent=1 // pred_check_branch
      %49 = sbr.rel (0) target = $region45
    $region44: #{tpu_custom_call.1} parent=1 // pred_region
      _
    $region45: #{tpu_custom_call.1} parent=1 // pred_fallthru
      _
    // Predicated region
    $region46: #{tpu_custom_call.1} parent=1 // pred_check
      _
    $region47: #{tpu_custom_call.1} parent=1 // pred_check_branch
      %51 = sbr.rel (0) target = $region49
    $region48: #{tpu_custom_call.1} parent=1 // pred_region
      %53 = dma.done [#allocation3], 16
    $region49: #{tpu_custom_call.1} parent=1 // pred_fallthru
      _
    %v54 = vld [vmem:[%s0] sm:$0xff]
    %v55 = vld [vmem:[%s0 + $0x8] sm:$0xff]
    %v56 = vld [vmem:[%s0 + $0x10] sm:$0xff]
    %v57 = vld [vmem:[%s0 + $0x18] sm:$0xff]
    %v58 = vld [vmem:[%s0 + $0x20] sm:$0xff]
    %v59 = vld [vmem:[%s0 + $0x28] sm:$0xff]
    %v60 = vld [vmem:[%s0 + $0x30] sm:$0xff]
    %v61 = vld [vmem:[%s0 + $0x38] sm:$0xff]
    %v62 = vld [vmem:[%s0 + $0x40] sm:$0xff]
    %v63 = vld [vmem:[%s0 + $0x48] sm:$0xff]
    %v64 = vld [vmem:[%s0 + $0x50] sm:$0xff]
    %v65 = vld [vmem:[%s0 + $0x58] sm:$0xff]
    %v66 = vld [vmem:[#allocation2] sm:$0x1]
    %v67 = vld [vmem:[%s2] sm:$0x1]
    %vm68 = vcmask 261120
    %v69 = vsel %vm68, %v54, 0.0
    %70 = vadd.xlane.f32.xlu0 %v69
    %v71 = vpop.xlane.xlu0 %70
    %v72 = vsel %vm68, %v55, 0.0
    %73 = vadd.xlane.f32.xlu0 %v72
    %v74 = vpop.xlane.xlu0 %73
    %v75 = vsel %vm68, %v56, 0.0
    %76 = vadd.xlane.f32.xlu0 %v75
    %v77 = vpop.xlane.xlu0 %76
    %v78 = vsel %vm68, %v57, 0.0
    %79 = vadd.xlane.f32.xlu0 %v78
    %v80 = vpop.xlane.xlu0 %79
    %v81 = vsel %vm68, %v58, 0.0
    %82 = vadd.xlane.f32.xlu0 %v81
    %v83 = vpop.xlane.xlu0 %82
    %v84 = vsel %vm68, %v59, 0.0
    %85 = vadd.xlane.f32.xlu0 %v84
    %v86 = vpop.xlane.xlu0 %85
    %v87 = vsel %vm68, %v60, 0.0
    %88 = vadd.xlane.f32.xlu0 %v87
    %v89 = vpop.xlane.xlu0 %88
    %v90 = vsel %vm68, %v61, 0.0
    %91 = vadd.xlane.f32.xlu0 %v90
    %v92 = vpop.xlane.xlu0 %91
    %v93 = vsel %vm68, %v62, 0.0
    %94 = vadd.xlane.f32.xlu0 %v93
    %v95 = vpop.xlane.xlu0 %94
    %v96 = vsel %vm68, %v63, 0.0
    %97 = vadd.xlane.f32.xlu0 %v96
    %v98 = vpop.xlane.xlu0 %97
    %v99 = vsel %vm68, %v64, 0.0
    %100 = vadd.xlane.f32.xlu0 %v99
    %v101 = vpop.xlane.xlu0 %100
    %v102 = vsel %vm68, %v65, 0.0
    %103 = vadd.xlane.f32.xlu0 %v102
    %v104 = vpop.xlane.xlu0 %103
    %v105 = vrcp.pop 32.0
    %v106 = vmul.f32 32.0, %v105
    %v107 = vsub.f32 1.0, %v106
    %v108 = vmul.f32 %v105, %v107
    %v109 = vadd.f32 %v105, %v108
    %vm110 = vweird.f32 %v105
    %v111 = vsel %vm110, %v105, %v109
    %v112 = vmul.f32 %v71, %v111
    %v113 = vmul.f32 %v74, %v111
    %v114 = vmul.f32 %v77, %v111
    %v115 = vmul.f32 %v80, %v111
    %v116 = vmul.f32 %v83, %v111
    %v117 = vmul.f32 %v86, %v111
    %v118 = vmul.f32 %v89, %v111
    %v119 = vmul.f32 %v92, %v111
    %v120 = vmul.f32 %v95, %v111
    %v121 = vmul.f32 %v98, %v111
    %v122 = vmul.f32 %v101, %v111
    %v123 = vmul.f32 %v104, %v111
    %v124 = vsub.f32 %v54, %v112
    %v125 = vsub.f32 %v55, %v113
    %v126 = vsub.f32 %v56, %v114
    %v127 = vsub.f32 %v57, %v115
    %v128 = vsub.f32 %v58, %v116
    %v129 = vsub.f32 %v59, %v117
    %v130 = vsub.f32 %v60, %v118
    %v131 = vsub.f32 %v61, %v119
    %v132 = vsub.f32 %v62, %v120
    %v133 = vsub.f32 %v63, %v121
    %v134 = vsub.f32 %v64, %v122
    %v135 = vsub.f32 %v65, %v123
    %v136 = vmul.f32 %v124, %v124
    %v137 = vmul.f32 %v125, %v125
    %v138 = vmul.f32 %v126, %v126
    %v139 = vmul.f32 %v127, %v127
    %v140 = vmul.f32 %v128, %v128
    %v141 = vmul.f32 %v129, %v129
    %v142 = vmul.f32 %v130, %v130
    %v143 = vmul.f32 %v131, %v131
    %v144 = vmul.f32 %v132, %v132
    %v145 = vmul.f32 %v133, %v133
    %v146 = vmul.f32 %v134, %v134
    %v147 = vmul.f32 %v135, %v135
    %v148 = vsel %vm68, %v136, 0.0
    %149 = vadd.xlane.f32.xlu0 %v148
    %v150 = vpop.xlane.xlu0 %149
    %v151 = vsel %vm68, %v137, 0.0
    %152 = vadd.xlane.f32.xlu0 %v151
    %v153 = vpop.xlane.xlu0 %152
    %v154 = vsel %vm68, %v138, 0.0
    %155 = vadd.xlane.f32.xlu0 %v154
    %v156 = vpop.xlane.xlu0 %155
    %v157 = vsel %vm68, %v139, 0.0
    %158 = vadd.xlane.f32.xlu0 %v157
    %v159 = vpop.xlane.xlu0 %158
    %v160 = vsel %vm68, %v140, 0.0
    %161 = vadd.xlane.f32.xlu0 %v160
    %v162 = vpop.xlane.xlu0 %161
    %v163 = vsel %vm68, %v141, 0.0
    %164 = vadd.xlane.f32.xlu0 %v163
    %v165 = vpop.xlane.xlu0 %164
    %v166 = vsel %vm68, %v142, 0.0
    %167 = vadd.xlane.f32.xlu0 %v166
    %v168 = vpop.xlane.xlu0 %167
    %v169 = vsel %vm68, %v143, 0.0
    %170 = vadd.xlane.f32.xlu0 %v169
    %v171 = vpop.xlane.xlu0 %170
    %v172 = vsel %vm68, %v144, 0.0
    %173 = vadd.xlane.f32.xlu0 %v172
    %v174 = vpop.xlane.xlu0 %173
    %v175 = vsel %vm68, %v145, 0.0
    %176 = vadd.xlane.f32.xlu0 %v175
    %v177 = vpop.xlane.xlu0 %176
    %v178 = vsel %vm68, %v146, 0.0
    %179 = vadd.xlane.f32.xlu0 %v178
    %v180 = vpop.xlane.xlu0 %179
    %v181 = vsel %vm68, %v147, 0.0
    %182 = vadd.xlane.f32.xlu0 %v181
    %v183 = vpop.xlane.xlu0 %182
    %v184 = vmul.f32 %v150, %v111
    %v185 = vmul.f32 %v153, %v111
    %v186 = vmul.f32 %v156, %v111
    %v187 = vmul.f32 %v159, %v111
    %v188 = vmul.f32 %v162, %v111
    %v189 = vmul.f32 %v165, %v111
    %v190 = vmul.f32 %v168, %v111
    %v191 = vmul.f32 %v171, %v111
    %v192 = vmul.f32 %v174, %v111
    %v193 = vmul.f32 %v177, %v111
    %v194 = vmul.f32 %v180, %v111
    %v195 = vmul.f32 %v183, %v111
    %v196 = vadd.f32 %v184, 1e-05
    %v197 = vadd.f32 %v185, 1e-05
    %v198 = vadd.f32 %v186, 1e-05
    %v199 = vadd.f32 %v187, 1e-05
    %v200 = vadd.f32 %v188, 1e-05
    %v201 = vadd.f32 %v189, 1e-05
    %v202 = vadd.f32 %v190, 1e-05
    %v203 = vadd.f32 %v191, 1e-05
    %v204 = vadd.f32 %v192, 1e-05
    %v205 = vadd.f32 %v193, 1e-05
    %v206 = vadd.f32 %v194, 1e-05
    %v207 = vadd.f32 %v195, 1e-05
    %v208 = vrsqrt.pop %v196
    %v209 = vmul.f32 %v208, %v196
    %v210 = vmul.f32 %v209, %v208
    %v211 = vmul.f32 0.5, %v210
    %v212 = vsub.f32 1.5, %v211
    %v213 = vmul.f32 %v208, %v212
    %vm214 = vweird.f32 %v196
    %vm215 = vweird.f32 %v208
    %vm216 = vmor %vm214, %vm215
    %v217 = vsel %vm216, %v208, %v213
    %v218 = vrsqrt.pop %v197
    %v219 = vmul.f32 %v218, %v197
    %v220 = vmul.f32 %v219, %v218
    %v221 = vmul.f32 0.5, %v220
    %v222 = vsub.f32 1.5, %v221
    %v223 = vmul.f32 %v218, %v222
    %vm224 = vweird.f32 %v197
    %vm225 = vweird.f32 %v218
    %vm226 = vmor %vm224, %vm225
    %v227 = vsel %vm226, %v218, %v223
    %v228 = vrsqrt.pop %v198
    %v229 = vmul.f32 %v228, %v198
    %v230 = vmul.f32 %v229, %v228
    %v231 = vmul.f32 0.5, %v230
    %v232 = vsub.f32 1.5, %v231
    %v233 = vmul.f32 %v228, %v232
    %vm234 = vweird.f32 %v198
    %vm235 = vweird.f32 %v228
    %vm236 = vmor %vm234, %vm235
    %v237 = vsel %vm236, %v228, %v233
    %v238 = vrsqrt.pop %v199
    %v239 = vmul.f32 %v238, %v199
    %v240 = vmul.f32 %v239, %v238
    %v241 = vmul.f32 0.5, %v240
    %v242 = vsub.f32 1.5, %v241
    %v243 = vmul.f32 %v238, %v242
    %vm244 = vweird.f32 %v199
    %vm245 = vweird.f32 %v238
    %vm246 = vmor %vm244, %vm245
    %v247 = vsel %vm246, %v238, %v243
    %v248 = vrsqrt.pop %v200
    %v249 = vmul.f32 %v248, %v200
    %v250 = vmul.f32 %v249, %v248
    %v251 = vmul.f32 0.5, %v250
    %v252 = vsub.f32 1.5, %v251
    %v253 = vmul.f32 %v248, %v252
    %vm254 = vweird.f32 %v200
    %vm255 = vweird.f32 %v248
    %vm256 = vmor %vm254, %vm255
    %v257 = vsel %vm256, %v248, %v253
    %v258 = vrsqrt.pop %v201
    %v259 = vmul.f32 %v258, %v201
    %v260 = vmul.f32 %v259, %v258
    %v261 = vmul.f32 0.5, %v260
    %v262 = vsub.f32 1.5, %v261
    %v263 = vmul.f32 %v258, %v262
    %vm264 = vweird.f32 %v201
    %vm265 = vweird.f32 %v258
    %vm266 = vmor %vm264, %vm265
    %v267 = vsel %vm266, %v258, %v263
    %v268 = vrsqrt.pop %v202
    %v269 = vmul.f32 %v268, %v202
    %v270 = vmul.f32 %v269, %v268
    %v271 = vmul.f32 0.5, %v270
    %v272 = vsub.f32 1.5, %v271
    %v273 = vmul.f32 %v268, %v272
    %vm274 = vweird.f32 %v202
    %vm275 = vweird.f32 %v268
    %vm276 = vmor %vm274, %vm275
    %v277 = vsel %vm276, %v268, %v273
    %v278 = vrsqrt.pop %v203
    %v279 = vmul.f32 %v278, %v203
    %v280 = vmul.f32 %v279, %v278
    %v281 = vmul.f32 0.5, %v280
    %v282 = vsub.f32 1.5, %v281
    %v283 = vmul.f32 %v278, %v282
    %vm284 = vweird.f32 %v203
    %vm285 = vweird.f32 %v278
    %vm286 = vmor %vm284, %vm285
    %v287 = vsel %vm286, %v278, %v283
    %v288 = vrsqrt.pop %v204
    %v289 = vmul.f32 %v288, %v204
    %v290 = vmul.f32 %v289, %v288
    %v291 = vmul.f32 0.5, %v290
    %v292 = vsub.f32 1.5, %v291
    %v293 = vmul.f32 %v288, %v292
    %vm294 = vweird.f32 %v204
    %vm295 = vweird.f32 %v288
    %vm296 = vmor %vm294, %vm295
    %v297 = vsel %vm296, %v288, %v293
    %v298 = vrsqrt.pop %v205
    %v299 = vmul.f32 %v298, %v205
    %v300 = vmul.f32 %v299, %v298
    %v301 = vmul.f32 0.5, %v300
    %v302 = vsub.f32 1.5, %v301
    %v303 = vmul.f32 %v298, %v302
    %vm304 = vweird.f32 %v205
    %vm305 = vweird.f32 %v298
    %vm306 = vmor %vm304, %vm305
    %v307 = vsel %vm306, %v298, %v303
    %v308 = vrsqrt.pop %v206
    %v309 = vmul.f32 %v308, %v206
    %v310 = vmul.f32 %v309, %v308
    %v311 = vmul.f32 0.5, %v310
    %v312 = vsub.f32 1.5, %v311
    %v313 = vmul.f32 %v308, %v312
    %vm314 = vweird.f32 %v206
    %vm315 = vweird.f32 %v308
    %vm316 = vmor %vm314, %vm315
    %v317 = vsel %vm316, %v308, %v313
    %v318 = vrsqrt.pop %v207
    %v319 = vmul.f32 %v318, %v207
    %v320 = vmul.f32 %v319, %v318
    %v321 = vmul.f32 0.5, %v320
    %v322 = vsub.f32 1.5, %v321
    %v323 = vmul.f32 %v318, %v322
    %vm324 = vweird.f32 %v207
    %vm325 = vweird.f32 %v318
    %vm326 = vmor %vm324, %vm325
    %v327 = vsel %vm326, %v318, %v323
    %v328 = vmul.f32 %v124, %v217
    %v329 = vmul.f32 %v125, %v227
    %v330 = vmul.f32 %v126, %v237
    %v331 = vmul.f32 %v127, %v247
    %v332 = vmul.f32 %v128, %v257
    %v333 = vmul.f32 %v129, %v267
    %v334 = vmul.f32 %v130, %v277
    %v335 = vmul.f32 %v131, %v287
    %v336 = vmul.f32 %v132, %v297
    %v337 = vmul.f32 %v133, %v307
    %v338 = vmul.f32 %v134, %v317
    %v339 = vmul.f32 %v135, %v327
    %v341 = vperm.slane %v66, 0
    %v343 = vmul.f32 %v328, %v341
    %v344 = vmul.f32 %v329, %v341
    %v345 = vmul.f32 %v330, %v341
    %v346 = vmul.f32 %v331, %v341
    %v347 = vmul.f32 %v332, %v341
    %v348 = vmul.f32 %v333, %v341
    %v349 = vmul.f32 %v334, %v341
    %v350 = vmul.f32 %v335, %v341
    %v351 = vmul.f32 %v336, %v341
    %v352 = vmul.f32 %v337, %v341
    %v353 = vmul.f32 %v338, %v341
    %v354 = vmul.f32 %v339, %v341
    %v356 = vperm.slane %v67, 0
    %v358 = vadd.f32 %v343, %v356
    %v359 = vadd.f32 %v344, %v356
    %v360 = vadd.f32 %v345, %v356
    %v361 = vadd.f32 %v346, %v356
    %v362 = vadd.f32 %v347, %v356
    %v363 = vadd.f32 %v348, %v356
    %v364 = vadd.f32 %v349, %v356
    %v365 = vadd.f32 %v350, %v356
    %v366 = vadd.f32 %v351, %v356
    %v367 = vadd.f32 %v352, %v356
    %v368 = vadd.f32 %v353, %v356
    %v369 = vadd.f32 %v354, %v356
    %v370 = vld [vmem:[%s3] sm:$0xff]
    %v371 = vld [vmem:[%s3 + $0x8] sm:$0xff]
    %v372 = vld [vmem:[%s3 + $0x10] sm:$0xff]
    %v373 = vld [vmem:[%s3 + $0x18] sm:$0xff]
    %v374 = vld [vmem:[%s4] sm:$0x1]
    %v376 = vperm.slane %v374, 0
    %v379 = vsel %vm68, %v358, 0
    %v382 = vsel %vm68, %v359, 0
    %v385 = vsel %vm68, %v360, 0
    %v388 = vsel %vm68, %v361, 0
    %v391 = vsel %vm68, %v362, 0
    %v394 = vsel %vm68, %v363, 0
    %v397 = vsel %vm68, %v364, 0
    %v400 = vsel %vm68, %v365, 0
    %v403 = vsel %vm68, %v366, 0
    %v406 = vsel %vm68, %v367, 0
    %v409 = vsel %vm68, %v368, 0
    %v412 = vsel %vm68, %v369, 0
    %414 = vmatpush.msra.mxu0 0.0
    %415 = vmatpush.msra.mxu0 0.0
    %416 = vmatpush.msra.mxu0 0.0
    %417 = vmatpush.msra.mxu0 0.0
    %418 = vmatpush.msra.mxu0 0.0
    %419 = vmatpush.msra.mxu0 0.0
    %420 = vmatpush.msra.mxu0 0.0
    %421 = vmatpush.msra.mxu0 0.0
    %422 = vmatpush.msra.mxu0 0.0
    %423 = vmatpush.msra.mxu0 0.0
    %424 = vmatpush.msra.mxu0 0.0
    %425 = vmatpush.msra.mxu0 0.0
    %426 = vmatpush.msra.mxu0 %v373
    %427 = vmatpush.msra.mxu0 %v372
    %428 = vmatpush.msra.mxu0 %v371
    %429 = vmatpush.msra.mxu0 %v370
    %430 = vmatmul.f32.gmra.mxu0 %v379
    %v431 = vpop.f32.mrf.mxu0
    %v432 = vadd.f32 %v376, %v431
    %433 = vmatmul.f32.gmra.mxu0 %v382
    %v434 = vpop.f32.mrf.mxu0
    %v435 = vadd.f32 %v376, %v434
    %436 = vmatmul.f32.gmra.mxu0 %v385
    %v437 = vpop.f32.mrf.mxu0
    %v438 = vadd.f32 %v376, %v437
    %439 = vmatmul.f32.gmra.mxu0 %v388
    %v440 = vpop.f32.mrf.mxu0
    %v441 = vadd.f32 %v376, %v440
    %442 = vmatmul.f32.gmra.mxu0 %v391
    %v443 = vpop.f32.mrf.mxu0
    %v444 = vadd.f32 %v376, %v443
    %445 = vmatmul.f32.gmra.mxu0 %v394
    %v446 = vpop.f32.mrf.mxu0
    %v447 = vadd.f32 %v376, %v446
    %448 = vmatmul.f32.gmra.mxu0 %v397
    %v449 = vpop.f32.mrf.mxu0
    %v450 = vadd.f32 %v376, %v449
    %451 = vmatmul.f32.gmra.mxu0 %v400
    %v452 = vpop.f32.mrf.mxu0
    %v453 = vadd.f32 %v376, %v452
    %454 = vmatmul.f32.gmra.mxu0 %v403
    %v455 = vpop.f32.mrf.mxu0
    %v456 = vadd.f32 %v376, %v455
    %457 = vmatmul.f32.gmra.mxu0 %v406
    %v458 = vpop.f32.mrf.mxu0
    %v459 = vadd.f32 %v376, %v458
    %460 = vmatmul.f32.gmra.mxu0 %v409
    %v461 = vpop.f32.mrf.mxu0
    %v462 = vadd.f32 %v376, %v461
    %463 = vmatmul.f32.gmra.mxu0 %v412
    %v464 = vpop.f32.mrf.mxu0
    %v465 = vadd.f32 %v376, %v464
    %466 = vdwg.mxu0
    %v467 = vmax.f32 %v432, 0.0
    %v468 = vmax.f32 %v435, 0.0
    %v469 = vmax.f32 %v438, 0.0
    %v470 = vmax.f32 %v441, 0.0
    %v471 = vmax.f32 %v444, 0.0
    %v472 = vmax.f32 %v447, 0.0
    %v473 = vmax.f32 %v450, 0.0
    %v474 = vmax.f32 %v453, 0.0
    %v475 = vmax.f32 %v456, 0.0
    %v476 = vmax.f32 %v459, 0.0
    %v477 = vmax.f32 %v462, 0.0
    %v478 = vmax.f32 %v465, 0.0
    %v479 = vld [vmem:[%s5] sm:$0xff]
    %v480 = vld [vmem:[%s5 + $0x8] sm:$0xff]
    %v481 = vld [vmem:[%s5 + $0x10] sm:$0xff]
    %v482 = vld [vmem:[%s5 + $0x18] sm:$0xff]
    %v483 = vld [vmem:[%s6] sm:$0x1]
    %v485 = vperm.slane %v483, 0
    %v488 = vsel %vm68, %v467, 0
    %v491 = vsel %vm68, %v468, 0
    %v494 = vsel %vm68, %v469, 0
    %v497 = vsel %vm68, %v470, 0
    %v500 = vsel %vm68, %v471, 0
    %v503 = vsel %vm68, %v472, 0
    %v506 = vsel %vm68, %v473, 0
    %v509 = vsel %vm68, %v474, 0
    %v512 = vsel %vm68, %v475, 0
    %v515 = vsel %vm68, %v476, 0
    %v518 = vsel %vm68, %v477, 0
    %v521 = vsel %vm68, %v478, 0
    %523 = vmatpush.msra.mxu0 0.0
    %524 = vmatpush.msra.mxu0 0.0
    %525 = vmatpush.msra.mxu0 0.0
    %526 = vmatpush.msra.mxu0 0.0
    %527 = vmatpush.msra.mxu0 0.0
    %528 = vmatpush.msra.mxu0 0.0
    %529 = vmatpush.msra.mxu0 0.0
    %530 = vmatpush.msra.mxu0 0.0
    %531 = vmatpush.msra.mxu0 0.0
    %532 = vmatpush.msra.mxu0 0.0
    %533 = vmatpush.msra.mxu0 0.0
    %534 = vmatpush.msra.mxu0 0.0
    %535 = vmatpush.msra.mxu0 %v482
    %536 = vmatpush.msra.mxu0 %v481
    %537 = vmatpush.msra.mxu0 %v480
    %538 = vmatpush.msra.mxu0 %v479
    %539 = vmatmul.f32.gmra.mxu0 %v488
    %v540 = vpop.f32.mrf.mxu0
    %v541 = vadd.f32 %v485, %v540
    %542 = vmatmul.f32.gmra.mxu0 %v491
    %v543 = vpop.f32.mrf.mxu0
    %v544 = vadd.f32 %v485, %v543
    %545 = vmatmul.f32.gmra.mxu0 %v494
    %v546 = vpop.f32.mrf.mxu0
    %v547 = vadd.f32 %v485, %v546
    %548 = vmatmul.f32.gmra.mxu0 %v497
    %v549 = vpop.f32.mrf.mxu0
    %v550 = vadd.f32 %v485, %v549
    %551 = vmatmul.f32.gmra.mxu0 %v500
    %v552 = vpop.f32.mrf.mxu0
    %v553 = vadd.f32 %v485, %v552
    %554 = vmatmul.f32.gmra.mxu0 %v503
    %v555 = vpop.f32.mrf.mxu0
    %v556 = vadd.f32 %v485, %v555
    %557 = vmatmul.f32.gmra.mxu0 %v506
    %v558 = vpop.f32.mrf.mxu0
    %v559 = vadd.f32 %v485, %v558
    %560 = vmatmul.f32.gmra.mxu0 %v509
    %v561 = vpop.f32.mrf.mxu0
    %v562 = vadd.f32 %v485, %v561
    %563 = vmatmul.f32.gmra.mxu0 %v512
    %v564 = vpop.f32.mrf.mxu0
    %v565 = vadd.f32 %v485, %v564
    %566 = vmatmul.f32.gmra.mxu0 %v515
    %v567 = vpop.f32.mrf.mxu0
    %v568 = vadd.f32 %v485, %v567
    %569 = vmatmul.f32.gmra.mxu0 %v518
    %v570 = vpop.f32.mrf.mxu0
    %v571 = vadd.f32 %v485, %v570
    %572 = vmatmul.f32.gmra.mxu0 %v521
    %v573 = vpop.f32.mrf.mxu0
    %v574 = vadd.f32 %v485, %v573
    %575 = vdwg.mxu0
    %v576 = vld [vmem:[%s7] sm:$0x1]
    %v577 = vld [vmem:[%s8] sm:$0x1]
    %v578 = vsel %vm68, %v541, 0.0
    %579 = vadd.xlane.f32.xlu0 %v578
    %v580 = vpop.xlane.xlu0 %579
    %v581 = vsel %vm68, %v544, 0.0
    %582 = vadd.xlane.f32.xlu0 %v581
    %v583 = vpop.xlane.xlu0 %582
    %v584 = vsel %vm68, %v547, 0.0
    %585 = vadd.xlane.f32.xlu0 %v584
    %v586 = vpop.xlane.xlu0 %585
    %v587 = vsel %vm68, %v550, 0.0
    %588 = vadd.xlane.f32.xlu0 %v587
    %v589 = vpop.xlane.xlu0 %588
    %v590 = vsel %vm68, %v553, 0.0
    %591 = vadd.xlane.f32.xlu0 %v590
    %v592 = vpop.xlane.xlu0 %591
    %v593 = vsel %vm68, %v556, 0.0
    %594 = vadd.xlane.f32.xlu0 %v593
    %v595 = vpop.xlane.xlu0 %594
    %v596 = vsel %vm68, %v559, 0.0
    %597 = vadd.xlane.f32.xlu0 %v596
    %v598 = vpop.xlane.xlu0 %597
    %v599 = vsel %vm68, %v562, 0.0
    %600 = vadd.xlane.f32.xlu0 %v599
    %v601 = vpop.xlane.xlu0 %600
    %v602 = vsel %vm68, %v565, 0.0
    %603 = vadd.xlane.f32.xlu0 %v602
    %v604 = vpop.xlane.xlu0 %603
    %v605 = vsel %vm68, %v568, 0.0
    %606 = vadd.xlane.f32.xlu0 %v605
    %v607 = vpop.xlane.xlu0 %606
    %v608 = vsel %vm68, %v571, 0.0
    %609 = vadd.xlane.f32.xlu0 %v608
    %v610 = vpop.xlane.xlu0 %609
    %v611 = vsel %vm68, %v574, 0.0
    %612 = vadd.xlane.f32.xlu0 %v611
    %v613 = vpop.xlane.xlu0 %612
    %v614 = vmul.f32 %v580, %v111
    %v615 = vmul.f32 %v583, %v111
    %v616 = vmul.f32 %v586, %v111
    %v617 = vmul.f32 %v589, %v111
    %v618 = vmul.f32 %v592, %v111
    %v619 = vmul.f32 %v595, %v111
    %v620 = vmul.f32 %v598, %v111
    %v621 = vmul.f32 %v601, %v111
    %v622 = vmul.f32 %v604, %v111
    %v623 = vmul.f32 %v607, %v111
    %v624 = vmul.f32 %v610, %v111
    %v625 = vmul.f32 %v613, %v111
    %v626 = vsub.f32 %v541, %v614
    %v627 = vsub.f32 %v544, %v615
    %v628 = vsub.f32 %v547, %v616
    %v629 = vsub.f32 %v550, %v617
    %v630 = vsub.f32 %v553, %v618
    %v631 = vsub.f32 %v556, %v619
    %v632 = vsub.f32 %v559, %v620
    %v633 = vsub.f32 %v562, %v621
    %v634 = vsub.f32 %v565, %v622
    %v635 = vsub.f32 %v568, %v623
    %v636 = vsub.f32 %v571, %v624
    %v637 = vsub.f32 %v574, %v625
    %v638 = vmul.f32 %v626, %v626
    %v639 = vmul.f32 %v627, %v627
    %v640 = vmul.f32 %v628, %v628
    %v641 = vmul.f32 %v629, %v629
    %v642 = vmul.f32 %v630, %v630
    %v643 = vmul.f32 %v631, %v631
    %v644 = vmul.f32 %v632, %v632
    %v645 = vmul.f32 %v633, %v633
    %v646 = vmul.f32 %v634, %v634
    %v647 = vmul.f32 %v635, %v635
    %v648 = vmul.f32 %v636, %v636
    %v649 = vmul.f32 %v637, %v637
    %v650 = vsel %vm68, %v638, 0.0
    %651 = vadd.xlane.f32.xlu0 %v650
    %v652 = vpop.xlane.xlu0 %651
    %v653 = vsel %vm68, %v639, 0.0
    %654 = vadd.xlane.f32.xlu0 %v653
    %v655 = vpop.xlane.xlu0 %654
    %v656 = vsel %vm68, %v640, 0.0
    %657 = vadd.xlane.f32.xlu0 %v656
    %v658 = vpop.xlane.xlu0 %657
    %v659 = vsel %vm68, %v641, 0.0
    %660 = vadd.xlane.f32.xlu0 %v659
    %v661 = vpop.xlane.xlu0 %660
    %v662 = vsel %vm68, %v642, 0.0
    %663 = vadd.xlane.f32.xlu0 %v662
    %v664 = vpop.xlane.xlu0 %663
    %v665 = vsel %vm68, %v643, 0.0
    %666 = vadd.xlane.f32.xlu0 %v665
    %v667 = vpop.xlane.xlu0 %666
    %v668 = vsel %vm68, %v644, 0.0
    %669 = vadd.xlane.f32.xlu0 %v668
    %v670 = vpop.xlane.xlu0 %669
    %v671 = vsel %vm68, %v645, 0.0
    %672 = vadd.xlane.f32.xlu0 %v671
    %v673 = vpop.xlane.xlu0 %672
    %v674 = vsel %vm68, %v646, 0.0
    %675 = vadd.xlane.f32.xlu0 %v674
    %v676 = vpop.xlane.xlu0 %675
    %v677 = vsel %vm68, %v647, 0.0
    %678 = vadd.xlane.f32.xlu0 %v677
    %v679 = vpop.xlane.xlu0 %678
    %v680 = vsel %vm68, %v648, 0.0
    %681 = vadd.xlane.f32.xlu0 %v680
    %v682 = vpop.xlane.xlu0 %681
    %v683 = vsel %vm68, %v649, 0.0
    %684 = vadd.xlane.f32.xlu0 %v683
    %v685 = vpop.xlane.xlu0 %684
    %v686 = vmul.f32 %v652, %v111
    %v687 = vmul.f32 %v655, %v111
    %v688 = vmul.f32 %v658, %v111
    %v689 = vmul.f32 %v661, %v111
    %v690 = vmul.f32 %v664, %v111
    %v691 = vmul.f32 %v667, %v111
    %v692 = vmul.f32 %v670, %v111
    %v693 = vmul.f32 %v673, %v111
    %v694 = vmul.f32 %v676, %v111
    %v695 = vmul.f32 %v679, %v111
    %v696 = vmul.f32 %v682, %v111
    %v697 = vmul.f32 %v685, %v111
    %v698 = vadd.f32 %v686, 1e-05
    %v699 = vadd.f32 %v687, 1e-05
    %v700 = vadd.f32 %v688, 1e-05
    %v701 = vadd.f32 %v689, 1e-05
    %v702 = vadd.f32 %v690, 1e-05
    %v703 = vadd.f32 %v691, 1e-05
    %v704 = vadd.f32 %v692, 1e-05
    %v705 = vadd.f32 %v693, 1e-05
    %v706 = vadd.f32 %v694, 1e-05
    %v707 = vadd.f32 %v695, 1e-05
    %v708 = vadd.f32 %v696, 1e-05
    %v709 = vadd.f32 %v697, 1e-05
    %v710 = vrsqrt.pop %v698
    %v711 = vmul.f32 %v710, %v698
    %v712 = vmul.f32 %v711, %v710
    %v713 = vmul.f32 0.5, %v712
    %v714 = vsub.f32 1.5, %v713
    %v715 = vmul.f32 %v710, %v714
    %vm716 = vweird.f32 %v698
    %vm717 = vweird.f32 %v710
    %vm718 = vmor %vm716, %vm717
    %v719 = vsel %vm718, %v710, %v715
    %v720 = vrsqrt.pop %v699
    %v721 = vmul.f32 %v720, %v699
    %v722 = vmul.f32 %v721, %v720
    %v723 = vmul.f32 0.5, %v722
    %v724 = vsub.f32 1.5, %v723
    %v725 = vmul.f32 %v720, %v724
    %vm726 = vweird.f32 %v699
    %vm727 = vweird.f32 %v720
    %vm728 = vmor %vm726, %vm727
    %v729 = vsel %vm728, %v720, %v725
    %v730 = vrsqrt.pop %v700
    %v731 = vmul.f32 %v730, %v700
    %v732 = vmul.f32 %v731, %v730
    %v733 = vmul.f32 0.5, %v732
    %v734 = vsub.f32 1.5, %v733
    %v735 = vmul.f32 %v730, %v734
    %vm736 = vweird.f32 %v700
    %vm737 = vweird.f32 %v730
    %vm738 = vmor %vm736, %vm737
    %v739 = vsel %vm738, %v730, %v735
    %v740 = vrsqrt.pop %v701
    %v741 = vmul.f32 %v740, %v701
    %v742 = vmul.f32 %v741, %v740
    %v743 = vmul.f32 0.5, %v742
    %v744 = vsub.f32 1.5, %v743
    %v745 = vmul.f32 %v740, %v744
    %vm746 = vweird.f32 %v701
    %vm747 = vweird.f32 %v740
    %vm748 = vmor %vm746, %vm747
    %v749 = vsel %vm748, %v740, %v745
    %v750 = vrsqrt.pop %v702
    %v751 = vmul.f32 %v750, %v702
    %v752 = vmul.f32 %v751, %v750
    %v753 = vmul.f32 0.5, %v752
    %v754 = vsub.f32 1.5, %v753
    %v755 = vmul.f32 %v750, %v754
    %vm756 = vweird.f32 %v702
    %vm757 = vweird.f32 %v750
    %vm758 = vmor %vm756, %vm757
    %v759 = vsel %vm758, %v750, %v755
    %v760 = vrsqrt.pop %v703
    %v761 = vmul.f32 %v760, %v703
    %v762 = vmul.f32 %v761, %v760
    %v763 = vmul.f32 0.5, %v762
    %v764 = vsub.f32 1.5, %v763
    %v765 = vmul.f32 %v760, %v764
    %vm766 = vweird.f32 %v703
    %vm767 = vweird.f32 %v760
    %vm768 = vmor %vm766, %vm767
    %v769 = vsel %vm768, %v760, %v765
    %v770 = vrsqrt.pop %v704
    %v771 = vmul.f32 %v770, %v704
    %v772 = vmul.f32 %v771, %v770
    %v773 = vmul.f32 0.5, %v772
    %v774 = vsub.f32 1.5, %v773
    %v775 = vmul.f32 %v770, %v774
    %vm776 = vweird.f32 %v704
    %vm777 = vweird.f32 %v770
    %vm778 = vmor %vm776, %vm777
    %v779 = vsel %vm778, %v770, %v775
    %v780 = vrsqrt.pop %v705
    %v781 = vmul.f32 %v780, %v705
    %v782 = vmul.f32 %v781, %v780
    %v783 = vmul.f32 0.5, %v782
    %v784 = vsub.f32 1.5, %v783
    %v785 = vmul.f32 %v780, %v784
    %vm786 = vweird.f32 %v705
    %vm787 = vweird.f32 %v780
    %vm788 = vmor %vm786, %vm787
    %v789 = vsel %vm788, %v780, %v785
    %v790 = vrsqrt.pop %v706
    %v791 = vmul.f32 %v790, %v706
    %v792 = vmul.f32 %v791, %v790
    %v793 = vmul.f32 0.5, %v792
    %v794 = vsub.f32 1.5, %v793
    %v795 = vmul.f32 %v790, %v794
    %vm796 = vweird.f32 %v706
    %vm797 = vweird.f32 %v790
    %vm798 = vmor %vm796, %vm797
    %v799 = vsel %vm798, %v790, %v795
    %v800 = vrsqrt.pop %v707
    %v801 = vmul.f32 %v800, %v707
    %v802 = vmul.f32 %v801, %v800
    %v803 = vmul.f32 0.5, %v802
    %v804 = vsub.f32 1.5, %v803
    %v805 = vmul.f32 %v800, %v804
    %vm806 = vweird.f32 %v707
    %vm807 = vweird.f32 %v800
    %vm808 = vmor %vm806, %vm807
    %v809 = vsel %vm808, %v800, %v805
    %v810 = vrsqrt.pop %v708
    %v811 = vmul.f32 %v810, %v708
    %v812 = vmul.f32 %v811, %v810
    %v813 = vmul.f32 0.5, %v812
    %v814 = vsub.f32 1.5, %v813
    %v815 = vmul.f32 %v810, %v814
    %vm816 = vweird.f32 %v708
    %vm817 = vweird.f32 %v810
    %vm818 = vmor %vm816, %vm817
    %v819 = vsel %vm818, %v810, %v815
    %v820 = vrsqrt.pop %v709
    %v821 = vmul.f32 %v820, %v709
    %v822 = vmul.f32 %v821, %v820
    %v823 = vmul.f32 0.5, %v822
    %v824 = vsub.f32 1.5, %v823
    %v825 = vmul.f32 %v820, %v824
    %vm826 = vweird.f32 %v709
    %vm827 = vweird.f32 %v820
    %vm828 = vmor %vm826, %vm827
    %v829 = vsel %vm828, %v820, %v825
    %v830 = vmul.f32 %v626, %v719
    %v831 = vmul.f32 %v627, %v729
    %v832 = vmul.f32 %v628, %v739
    %v833 = vmul.f32 %v629, %v749
    %v834 = vmul.f32 %v630, %v759
    %v835 = vmul.f32 %v631, %v769
    %v836 = vmul.f32 %v632, %v779
    %v837 = vmul.f32 %v633, %v789
    %v838 = vmul.f32 %v634, %v799
    %v839 = vmul.f32 %v635, %v809
    %v840 = vmul.f32 %v636, %v819
    %v841 = vmul.f32 %v637, %v829
    %v843 = vperm.slane %v576, 0
    %v845 = vmul.f32 %v830, %v843
    %v846 = vmul.f32 %v831, %v843
    %v847 = vmul.f32 %v832, %v843
    %v848 = vmul.f32 %v833, %v843
    %v849 = vmul.f32 %v834, %v843
    %v850 = vmul.f32 %v835, %v843
    %v851 = vmul.f32 %v836, %v843
    %v852 = vmul.f32 %v837, %v843
    %v853 = vmul.f32 %v838, %v843
    %v854 = vmul.f32 %v839, %v843
    %v855 = vmul.f32 %v840, %v843
    %v856 = vmul.f32 %v841, %v843
    %v858 = vperm.slane %v577, 0
    %v860 = vadd.f32 %v845, %v858
    %v861 = vadd.f32 %v846, %v858
    %v862 = vadd.f32 %v847, %v858
    %v863 = vadd.f32 %v848, %v858
    %v864 = vadd.f32 %v849, %v858
    %v865 = vadd.f32 %v850, %v858
    %v866 = vadd.f32 %v851, %v858
    %v867 = vadd.f32 %v852, %v858
    %v868 = vadd.f32 %v853, %v858
    %v869 = vadd.f32 %v854, %v858
    %v870 = vadd.f32 %v855, %v858
    %v871 = vadd.f32 %v856, %v858
    %v872 = vld [vmem:[%s9] sm:$0xff]
    %v873 = vld [vmem:[%s9 + $0x8] sm:$0xff]
    %v874 = vld [vmem:[%s9 + $0x10] sm:$0xff]
    %v875 = vld [vmem:[%s9 + $0x18] sm:$0xff]
    %v877 = vsel %vm68, %v860, 0
    %v880 = vsel %vm68, %v861, 0
    %v883 = vsel %vm68, %v862, 0
    %v886 = vsel %vm68, %v863, 0
    %v889 = vsel %vm68, %v864, 0
    %v892 = vsel %vm68, %v865, 0
    %v895 = vsel %vm68, %v866, 0
    %v898 = vsel %vm68, %v867, 0
    %v901 = vsel %vm68, %v868, 0
    %v904 = vsel %vm68, %v869, 0
    %v907 = vsel %vm68, %v870, 0
    %v910 = vsel %vm68, %v871, 0
    %912 = vmatpush.msra.mxu0 0.0
    %913 = vmatpush.msra.mxu0 0.0
    %914 = vmatpush.msra.mxu0 0.0
    %915 = vmatpush.msra.mxu0 0.0
    %916 = vmatpush.msra.mxu0 0.0
    %917 = vmatpush.msra.mxu0 0.0
    %918 = vmatpush.msra.mxu0 0.0
    %919 = vmatpush.msra.mxu0 0.0
    %920 = vmatpush.msra.mxu0 0.0
    %921 = vmatpush.msra.mxu0 0.0
    %922 = vmatpush.msra.mxu0 0.0
    %923 = vmatpush.msra.mxu0 0.0
    %924 = vmatpush.msra.mxu0 %v875
    %925 = vmatpush.msra.mxu0 %v874
    %926 = vmatpush.msra.mxu0 %v873
    %927 = vmatpush.msra.mxu0 %v872
    %928 = vmatmul.f32.gmra.mxu0 %v877
    %v929 = vpop.f32.mrf.mxu0
    %v930 = vadd.f32 0.0, %v929
    %931 = vmatmul.f32.gmra.mxu0 %v880
    %v932 = vpop.f32.mrf.mxu0
    %v933 = vadd.f32 0.0, %v932
    %934 = vmatmul.f32.gmra.mxu0 %v883
    %v935 = vpop.f32.mrf.mxu0
    %v936 = vadd.f32 0.0, %v935
    %937 = vmatmul.f32.gmra.mxu0 %v886
    %v938 = vpop.f32.mrf.mxu0
    %v939 = vadd.f32 0.0, %v938
    %940 = vmatmul.f32.gmra.mxu0 %v889
    %v941 = vpop.f32.mrf.mxu0
    %v942 = vadd.f32 0.0, %v941
    %943 = vmatmul.f32.gmra.mxu0 %v892
    %v944 = vpop.f32.mrf.mxu0
    %v945 = vadd.f32 0.0, %v944
    %946 = vmatmul.f32.gmra.mxu0 %v895
    %v947 = vpop.f32.mrf.mxu0
    %v948 = vadd.f32 0.0, %v947
    %949 = vmatmul.f32.gmra.mxu0 %v898
    %v950 = vpop.f32.mrf.mxu0
    %v951 = vadd.f32 0.0, %v950
    %952 = vmatmul.f32.gmra.mxu0 %v901
    %v953 = vpop.f32.mrf.mxu0
    %v954 = vadd.f32 0.0, %v953
    %955 = vmatmul.f32.gmra.mxu0 %v904
    %v956 = vpop.f32.mrf.mxu0
    %v957 = vadd.f32 0.0, %v956
    %958 = vmatmul.f32.gmra.mxu0 %v907
    %v959 = vpop.f32.mrf.mxu0
    %v960 = vadd.f32 0.0, %v959
    %961 = vmatmul.f32.gmra.mxu0 %v910
    %v962 = vpop.f32.mrf.mxu0
    %v963 = vadd.f32 0.0, %v962
    %964 = vdwg.mxu0
    %965 = vst.msk [vmem:[%s11] sm:$0xff] %vm68, %v930
    %966 = vst.msk [vmem:[%s11 + $0x8] sm:$0xff] %vm68, %v933
    %967 = vst.msk [vmem:[%s11 + $0x10] sm:$0xff] %vm68, %v936
    %968 = vst.msk [vmem:[%s11 + $0x18] sm:$0xff] %vm68, %v939
    %969 = vst.msk [vmem:[%s11 + $0x20] sm:$0xff] %vm68, %v942
    %970 = vst.msk [vmem:[%s11 + $0x28] sm:$0xff] %vm68, %v945
    %971 = vst.msk [vmem:[%s11 + $0x30] sm:$0xff] %vm68, %v948
    %972 = vst.msk [vmem:[%s11 + $0x38] sm:$0xff] %vm68, %v951
    %973 = vst.msk [vmem:[%s11 + $0x40] sm:$0xff] %vm68, %v954
    %974 = vst.msk [vmem:[%s11 + $0x48] sm:$0xff] %vm68, %v957
    %975 = vst.msk [vmem:[%s11 + $0x50] sm:$0xff] %vm68, %v960
    %976 = vst.msk [vmem:[%s11 + $0x58] sm:$0xff] %vm68, %v963
    %v977 = vld [vmem:[%s10] sm:$0xff]
    %v978 = vld [vmem:[%s10 + $0x8] sm:$0xff]
    %v979 = vld [vmem:[%s10 + $0x10] sm:$0xff]
    %v980 = vld [vmem:[%s10 + $0x18] sm:$0xff]
    %981 = vmatpush.msra.mxu0 0.0
    %982 = vmatpush.msra.mxu0 0.0
    %983 = vmatpush.msra.mxu0 0.0
    %984 = vmatpush.msra.mxu0 0.0
    %985 = vmatpush.msra.mxu0 0.0
    %986 = vmatpush.msra.mxu0 0.0
    %987 = vmatpush.msra.mxu0 0.0
    %988 = vmatpush.msra.mxu0 0.0
    %989 = vmatpush.msra.mxu0 0.0
    %990 = vmatpush.msra.mxu0 0.0
    %991 = vmatpush.msra.mxu0 0.0
    %992 = vmatpush.msra.mxu0 0.0
    %993 = vmatpush.msra.mxu0 %v980
    %994 = vmatpush.msra.mxu0 %v979
    %995 = vmatpush.msra.mxu0 %v978
    %996 = vmatpush.msra.mxu0 %v977
    %997 = vmatmul.f32.gmra.mxu0 %v877
    %v998 = vpop.f32.mrf.mxu0
    %v999 = vadd.f32 0.0, %v998
    %1000 = vmatmul.f32.gmra.mxu0 %v880
    %v1001 = vpop.f32.mrf.mxu0
    %v1002 = vadd.f32 0.0, %v1001
    %1003 = vmatmul.f32.gmra.mxu0 %v883
    %v1004 = vpop.f32.mrf.mxu0
    %v1005 = vadd.f32 0.0, %v1004
    %1006 = vmatmul.f32.gmra.mxu0 %v886
    %v1007 = vpop.f32.mrf.mxu0
    %v1008 = vadd.f32 0.0, %v1007
    %1009 = vmatmul.f32.gmra.mxu0 %v889
    %v1010 = vpop.f32.mrf.mxu0
    %v1011 = vadd.f32 0.0, %v1010
    %1012 = vmatmul.f32.gmra.mxu0 %v892
    %v1013 = vpop.f32.mrf.mxu0
    %v1014 = vadd.f32 0.0, %v1013
    %1015 = vmatmul.f32.gmra.mxu0 %v895
    %v1016 = vpop.f32.mrf.mxu0
    %v1017 = vadd.f32 0.0, %v1016
    %1018 = vmatmul.f32.gmra.mxu0 %v898
    %v1019 = vpop.f32.mrf.mxu0
    %v1020 = vadd.f32 0.0, %v1019
    %1021 = vmatmul.f32.gmra.mxu0 %v901
    %v1022 = vpop.f32.mrf.mxu0
    %v1023 = vadd.f32 0.0, %v1022
    %1024 = vmatmul.f32.gmra.mxu0 %v904
    %v1025 = vpop.f32.mrf.mxu0
    %v1026 = vadd.f32 0.0, %v1025
    %1027 = vmatmul.f32.gmra.mxu0 %v907
    %v1028 = vpop.f32.mrf.mxu0
    %v1029 = vadd.f32 0.0, %v1028
    %1030 = vmatmul.f32.gmra.mxu0 %v910
    %v1031 = vpop.f32.mrf.mxu0
    %v1032 = vadd.f32 0.0, %v1031
    %1033 = vdwg.mxu0
    %1034 = vst.msk [vmem:[%s12] sm:$0xff] %vm68, %v999
    %1035 = vst.msk [vmem:[%s12 + $0x8] sm:$0xff] %vm68, %v1002
    %1036 = vst.msk [vmem:[%s12 + $0x10] sm:$0xff] %vm68, %v1005
    %1037 = vst.msk [vmem:[%s12 + $0x18] sm:$0xff] %vm68, %v1008
    %1038 = vst.msk [vmem:[%s12 + $0x20] sm:$0xff] %vm68, %v1011
    %1039 = vst.msk [vmem:[%s12 + $0x28] sm:$0xff] %vm68, %v1014
    %1040 = vst.msk [vmem:[%s12 + $0x30] sm:$0xff] %vm68, %v1017
    %1041 = vst.msk [vmem:[%s12 + $0x38] sm:$0xff] %vm68, %v1020
    %1042 = vst.msk [vmem:[%s12 + $0x40] sm:$0xff] %vm68, %v1023
    %1043 = vst.msk [vmem:[%s12 + $0x48] sm:$0xff] %vm68, %v1026
    %1044 = vst.msk [vmem:[%s12 + $0x50] sm:$0xff] %vm68, %v1029
    %1045 = vst.msk [vmem:[%s12 + $0x58] sm:$0xff] %vm68, %v1032
    // Predicated region
    $region50: #{tpu_custom_call.1} parent=1 // pred_check
      _
    $region51: #{tpu_custom_call.1} parent=1 // pred_check_branch
      %1047 = sbr.rel (0) target = $region53
    $region52: #{tpu_custom_call.1} parent=1 // pred_region
      _
    $region53: #{tpu_custom_call.1} parent=1 // pred_fallthru
      _
    // Predicated region
    $region54: #{tpu_custom_call.1} parent=1 // pred_check
      _
    $region55: #{tpu_custom_call.1} parent=1 // pred_check_branch
      %1049 = sbr.rel (0) target = $region57
    $region56: #{tpu_custom_call.1} parent=1 // pred_region
      _
    $region57: #{tpu_custom_call.1} parent=1 // pred_fallthru
      _
    // Predicated region
    $region58: #{tpu_custom_call.1} parent=1 // pred_check
      _
    $region59: #{tpu_custom_call.1} parent=1 // pred_check_branch
      %1051 = sbr.rel (0) target = $region61
    $region60: #{tpu_custom_call.1} parent=1 // pred_region
      _
    $region61: #{tpu_custom_call.1} parent=1 // pred_fallthru
      _
    // Predicated region
    $region62: #{tpu_custom_call.1} parent=1 // pred_check
      _
    $region63: #{tpu_custom_call.1} parent=1 // pred_check_branch
      %1053 = sbr.rel (0) target = $region65
    $region64: #{tpu_custom_call.1} parent=1 // pred_region
      _
    $region65: #{tpu_custom_call.1} parent=1 // pred_fallthru
      _
    %1054 = vsyncpa [#allocation3], 1

</llo_original>
